<compile_context>
chip_gen: v7x
topology: tpu7x:2x2x1
jax: 0.10.0
libtpu: 0.0.40
codegen_flags: <defaults>
</compile_context>

<pallas_src>
import functools

import jax
import jax.numpy as jnp
from jax.experimental import pallas as pl
from jax.experimental.pallas import tpu as pltpu


def _round_up(n, m):
    return ((n + m - 1) // m) * m


def _tpu_generation():
    """Best-effort TPU generation from device_kind; 0 if unknown."""
    try:
        kind = jax.devices()[0].device_kind.lower()
    except Exception:
        return 0
    for g in (7, 6, 5, 4, 3, 2):
        if f"v{g}" in kind or f"tpu{g}" in kind:
            return g
    return 0


# ---------------------------------------------------------------------------
# Kernel
# ---------------------------------------------------------------------------
def qnetwork_kernel(x_ref,
                    w1_ref, b1_ref,          # fused layer 1: (S, 2*Hp), (1, 2*Hp)
                    w2a_ref, b2a_ref,        # actor layer 2: (Hp, Hp), (1, Hp)
                    w2c_ref, b2c_ref,        # critic layer 2: (Hp, Hp), (1, Hp)
                    w3_ref,                  # fused layer 3: (2*Hp, OUT_W)
                    bout_ref,                # (1, OUT_W) combined bias
                    out_ref,                 # (TB, OUT_W) bf16 slab
                    *, act_bf16):
    Hp = w2a_ref.shape[0]

    def act(t, tanh=False):
        # relu (+ optional tanh); result in bf16, ready for the next MXU dot.
        if act_bf16:                                   # v6e/v7x: bf16 VPU + EUP
            t = jnp.maximum(t.astype(jnp.bfloat16), 0)
            return jnp.tanh(t) if tanh else t
        t = jnp.maximum(t, 0.0)                        # v5e: keep nonlinearities in f32
        if tanh:
            t = jnp.tanh(t)
        return t.astype(jnp.bfloat16)

    # ---- fused first layer (actor + critic share the same input x) ----
    x = x_ref[...].astype(jnp.bfloat16)
    hcat = jnp.dot(x, w1_ref[...], preferred_element_type=jnp.float32) + b1_ref[...]
    hcat = act(hcat)                                   # (TB, 2*Hp) bf16
    h = hcat[:, :Hp]                                   # actor hidden (lane-aligned split)
    g = hcat[:, Hp:]                                   # critic hidden

    # ---- actor fc2 -> relu -> tanh ; critic l2 -> relu ----
    h2 = act(jnp.dot(h, w2a_ref[...], preferred_element_type=jnp.float32) + b2a_ref[...],
             tanh=True)
    g2 = act(jnp.dot(g, w2c_ref[...], preferred_element_type=jnp.float32) + b2c_ref[...])

    # ---- fused layer 3: one K=2*Hp matmul into the lane-dense output slab ----
    h2g2 = jnp.concatenate([h2, g2], axis=-1)          # (TB, 2*Hp), 128-aligned boundary
    out = jnp.dot(h2g2, w3_ref[...], preferred_element_type=jnp.float32) + bout_ref[...]
    out_ref[...] = out.astype(out_ref.dtype)           # bf16 writeback


# ---------------------------------------------------------------------------
# Wrapper
# ---------------------------------------------------------------------------
def _choose_batch_tiling(B, num_cores):
    """Return (TB, Bp, nb).

    Small B (<=128): one 8-aligned tile.
    Large B: largest TB in {1024,512,256,128} such that the grid has at least
    `num_cores` steps (keeps both v7x TCs busy) and batch-padding waste stays
    under 1/8 of Bp; fall back to TB=128 (least padding) otherwise.
    """
    if B <= 128:
        tb = _round_up(B, 8)
        return tb, tb, 1
    for tb in (1024, 512, 256, 128):
        bp = _round_up(B, tb)
        nb = bp // tb
        if nb >= num_cores and (bp - B) * 8 <= bp:
            return tb, bp, nb
    tb = 128
    bp = _round_up(B, tb)
    return tb, bp, bp // tb


def qnetwork_forward(state, packed, action_size):
    """state: (B, state_size) f32. packed: dict from pack_params.
    Returns (mean, scale, v) — the parameters of Normal(mean, scale) and the value."""
    B, S = state.shape
    Hp = packed["w2a"].shape[0]
    OUT_W = packed["w3cat"].shape[1]

    gen = _tpu_generation()
    num_cores = 2 if gen >= 7 else 1     # v7x: 2 TCs share the "parallel" grid axis
    act_bf16 = gen >= 6                  # bf16 VPU/EUP only on v6e/v7x

    TB, Bp, nb = _choose_batch_tiling(B, num_cores)
    x = state if Bp == B else jnp.pad(state, ((0, Bp - B), (0, 0)))

    weight_args = (packed["w1cat"], packed["b1cat"],
                   packed["w2a"], packed["b2a"],
                   packed["w2c"], packed["b2c"],
                   packed["w3cat"], packed["bout"])

    # Weights/biases: full-array blocks, constant index_map -> DMA'd once, stay resident.
    in_specs = [pl.BlockSpec((TB, S), lambda i: (i, 0))]
    in_specs += [pl.BlockSpec(a.shape, lambda i: (0, 0)) for a in weight_args]
    out_specs = pl.BlockSpec((TB, OUT_W), lambda i: (i, 0))

    flops = 2 * Bp * (S * 2 * Hp + 2 * Hp * Hp + 2 * Hp * OUT_W)
    bytes_accessed = (x.size * 4 + Bp * OUT_W * 2
                      + sum(int(a.size) * a.dtype.itemsize for a in weight_args))

    out = pl.pallas_call(
        functools.partial(qnetwork_kernel, act_bf16=act_bf16),
        out_shape=jax.ShapeDtypeStruct((Bp, OUT_W), jnp.bfloat16),
        grid=(nb,),
        in_specs=in_specs,
        out_specs=out_specs,
        compiler_params=pltpu.CompilerParams(
            dimension_semantics=("parallel",)),
        cost_estimate=pl.CostEstimate(flops=flops,
                                      transcendentals=Bp * Hp,
                                      bytes_accessed=bytes_accessed),
    )(x, *weight_args)

    mean = out[:B, :action_size].astype(jnp.float32)
    v = out[:B, action_size:action_size + 1].astype(jnp.float32)
    # scale is input-independent: compute once outside the kernel, stable softplus.
    scale = jnp.broadcast_to(jax.nn.softplus(jnp.exp(packed["std"])), mean.shape)
    return mean, scale, v


# ---------------------------------------------------------------------------
# Parameter construction / packing
# ---------------------------------------------------------------------------
def init_params(key, state_size, action_size, fc1_units=202, fc2_units=202):
    """Deterministic synthetic init. Weights stored already transposed: (in, out)."""
    ks = jax.random.split(key, 12)

    def lin(kw, kb, fan_in, fan_out):
        bound = 1.0 / jnp.sqrt(fan_in)
        w = jax.random.uniform(kw, (fan_in, fan_out), jnp.float32, -bound, bound)
        b = jax.random.uniform(kb, (1, fan_out), jnp.float32, -bound, bound)
        return w, b

    w1, b1 = lin(ks[0], ks[1], state_size, fc1_units)
    w2, b2 = lin(ks[2], ks[3], fc1_units, fc2_units)
    w3, b3 = lin(ks[4], ks[5], fc2_units, action_size)
    lw1, lb1 = lin(ks[6], ks[7], state_size, fc1_units)
    lw2, lb2 = lin(ks[8], ks[9], fc1_units, fc2_units)
    lw3, lb3 = lin(ks[10], ks[11], fc2_units, 1)
    std = jnp.ones((1, action_size), jnp.float32)  # nn.Parameter(torch.ones(action_size))

    return dict(w1=w1, b1=b1, w2=w2, b2=b2, w3=w3, b3=b3,
                lw1=lw1, lb1=lb1, lw2=lw2, lb2=lb2, lw3=lw3, lb3=lb3,
                std=std)


def pack_params(p, state_size, action_size, fc1_units=202, fc2_units=202):
    """Pad hidden dims to a multiple of 128, fuse layer-1 and layer-3 weights,
    build the lane-dense layer-3 slab weights, cast weight matrices to bf16
    (biases stay f32). Zero padding + zero pad-biases keep padded units inert."""
    Hp = _round_up(max(fc1_units, fc2_units), 128)       # 202 -> 256
    OUT_W = 128
    assert action_size + 1 <= OUT_W

    # fused layer 1: [w1 | lw1]
    w1cat = jnp.zeros((state_size, 2 * Hp), jnp.float32)
    w1cat = w1cat.at[:, :fc1_units].set(p["w1"])
    w1cat = w1cat.at[:, Hp:Hp + fc1_units].set(p["lw1"])
    b1cat = jnp.zeros((1, 2 * Hp), jnp.float32)
    b1cat = b1cat.at[:, :fc1_units].set(p["b1"])
    b1cat = b1cat.at[:, Hp:Hp + fc1_units].set(p["lb1"])

    def pad2(w, r, c):
        return jnp.zeros((r, c), jnp.float32).at[:w.shape[0], :w.shape[1]].set(w)

    w2a = pad2(p["w2"], Hp, Hp)
    b2a = jnp.zeros((1, Hp), jnp.float32).at[:, :fc2_units].set(p["b2"])
    w2c = pad2(p["lw2"], Hp, Hp)
    b2c = jnp.zeros((1, Hp), jnp.float32).at[:, :fc2_units].set(p["lb2"])

    # fused layer 3: rows [0,Hp) = actor fc3 -> lanes [0, A); rows [Hp,2Hp) = critic l3 -> lane A.
    w3cat = jnp.zeros((2 * Hp, OUT_W), jnp.float32)
    w3cat = w3cat.at[:fc2_units, :action_size].set(p["w3"])
    w3cat = w3cat.at[Hp:Hp + fc2_units, action_size:action_size + 1].set(p["lw3"])
    bout = jnp.zeros((1, OUT_W), jnp.float32)
    bout = bout.at[:, :action_size].set(p["b3"])
    bout = bout.at[:, action_size:action_size + 1].set(p["lb3"])

    bf16 = lambda a: a.astype(jnp.bfloat16)
    return dict(w1cat=bf16(w1cat), b1cat=b1cat,
                w2a=bf16(w2a), b2a=b2a,
                w2c=bf16(w2c), b2c=b2c,
                w3cat=bf16(w3cat), bout=bout,
                std=p["std"])


# ---------------------------------------------------------------------------
# Reference (plain JAX, mirrors the PyTorch forward)
# ---------------------------------------------------------------------------
def reference_forward(state, p):
    # Weights are quantized to bf16 (and back) to mirror the kernel's weight
    # storage; activations stay f32.  Remaining differences vs. the kernel are
    # bf16 dot inputs and the bf16 output store (~1e-3..1e-2 level).
    q = lambda w: w.astype(jnp.bfloat16).astype(jnp.float32)
    h = jnp.maximum(state @ q(p["w1"]) + p["b1"], 0.0)
    h = jnp.maximum(h @ q(p["w2"]) + p["b2"], 0.0)
    h = jnp.tanh(h)
    mean = h @ q(p["w3"]) + p["b3"]
    g = jnp.maximum(state @ q(p["lw1"]) + p["lb1"], 0.0)
    g = jnp.maximum(g @ q(p["lw2"]) + p["lb2"], 0.0)
    v = g @ q(p["lw3"]) + p["lb3"]
    scale = jnp.broadcast_to(jax.nn.softplus(jnp.exp(p["std"])), mean.shape)
    return mean, scale, v


if __name__ == "__main__":
    key = jax.random.PRNGKey(0)
    k_param, k_state, k_state2 = jax.random.split(key, 3)

    state_size = 64
    action_size = 8

    params = init_params(k_param, state_size, action_size)
    packed = pack_params(params, state_size, action_size)

    # TODO(synk): torch.distributions.Normal has no Pallas equivalent; we return
    # (mean, scale, v) — the distribution's parameters — instead of a dist object.

    # Small batch: single-tile path.
    state = jax.random.normal(k_state, (8, state_size), jnp.float32)
    mean, scale, v = qnetwork_forward(state, packed, action_size)
    jax.block_until_ready((mean, scale, v))
    mean_ref, scale_ref, v_ref = reference_forward(state, params)
    # bf16 weights + bf16 dot inputs + bf16 output store (f32 accumulate) -> ~1e-2 error.
    assert jnp.allclose(mean, mean_ref, atol=3e-2, rtol=3e-2)
    assert jnp.allclose(scale, scale_ref, atol=1e-5, rtol=1e-5)
    assert jnp.allclose(v, v_ref, atol=3e-2, rtol=3e-2)

    # Non-multiple batch: exercises the tiled grid + padding path.
    state2 = jax.random.normal(k_state2, (300, state_size), jnp.float32)
    mean2, scale2, v2 = qnetwork_forward(state2, packed, action_size)
    jax.block_until_ready((mean2, scale2, v2))
    mean2_ref, scale2_ref, v2_ref = reference_forward(state2, params)
    assert mean2.shape == (300, action_size) and v2.shape == (300, 1)
    assert jnp.allclose(mean2, mean2_ref, atol=3e-2, rtol=3e-2)
    assert jnp.allclose(v2, v2_ref, atol=3e-2, rtol=3e-2)

    print("KERNEL_OK")
</pallas_src>

<mosaic_0001>
module attributes {stable_mosaic.version = 11 : i64} {
  func.func @qnetwork_kernel(%arg0: i32, %arg1: memref<8x64xf32, #tpu.memory_space<vmem>>, %arg2: memref<64x512xbf16, #tpu.memory_space<vmem>>, %arg3: memref<1x512xf32, #tpu.memory_space<vmem>>, %arg4: memref<256x256xbf16, #tpu.memory_space<vmem>>, %arg5: memref<1x256xf32, #tpu.memory_space<vmem>>, %arg6: memref<256x256xbf16, #tpu.memory_space<vmem>>, %arg7: memref<1x256xf32, #tpu.memory_space<vmem>>, %arg8: memref<512x128xbf16, #tpu.memory_space<vmem>>, %arg9: memref<1x128xf32, #tpu.memory_space<vmem>>, %arg10: memref<8x128xbf16, #tpu.memory_space<vmem>>) attributes {dimension_semantics = [#tpu.dimension_semantics<parallel>], iteration_bounds = array<i64: 1>, scalar_prefetch = 0 : i64, scratch_operands = 0 : i64, tpu.core_type = #tpu.core_type<tc>, window_params = [{transform_indices = @transform_0, window_bounds = array<i64: 8, 64>}, {pipeline_mode = #tpu.pipeline_mode<synchronous>, transform_indices = @transform_1, window_bounds = array<i64: 64, 512>}, {pipeline_mode = #tpu.pipeline_mode<synchronous>, transform_indices = @transform_2, window_bounds = array<i64: 1, 512>}, {pipeline_mode = #tpu.pipeline_mode<synchronous>, transform_indices = @transform_3, window_bounds = array<i64: 256, 256>}, {pipeline_mode = #tpu.pipeline_mode<synchronous>, transform_indices = @transform_4, window_bounds = array<i64: 1, 256>}, {pipeline_mode = #tpu.pipeline_mode<synchronous>, transform_indices = @transform_5, window_bounds = array<i64: 256, 256>}, {pipeline_mode = #tpu.pipeline_mode<synchronous>, transform_indices = @transform_6, window_bounds = array<i64: 1, 256>}, {pipeline_mode = #tpu.pipeline_mode<synchronous>, transform_indices = @transform_7, window_bounds = array<i64: 512, 128>}, {pipeline_mode = #tpu.pipeline_mode<synchronous>, transform_indices = @transform_8, window_bounds = array<i64: 1, 128>}, {transform_indices = @transform_9, window_bounds = array<i64: 8, 128>}]} {
    %c0 = arith.constant 0 : index
    %c0_0 = arith.constant 0 : index
    %0 = vector.load %arg1[%c0, %c0_0] : memref<8x64xf32, #tpu.memory_space<vmem>>, vector<8x64xf32>
    %1 = arith.truncf %0 : vector<8x64xf32> to vector<8x64xbf16>
    %c0_1 = arith.constant 0 : index
    %c0_2 = arith.constant 0 : index
    %2 = vector.load %arg2[%c0_1, %c0_2] : memref<64x512xbf16, #tpu.memory_space<vmem>>, vector<64x512xbf16>
    %cst = arith.constant dense<0.000000e+00> : vector<8x512xf32>
    %3 = tpu.matmul %1, %2, %cst {dimension_numbers = #tpu.dot_dimension_numbers<[1], [0], [0], [1], [0, 0, 1, 1], [], []>} : vector<8x64xbf16>, vector<64x512xbf16>, vector<8x512xf32> -> vector<8x512xf32>
    %c0_3 = arith.constant 0 : index
    %c0_4 = arith.constant 0 : index
    %4 = vector.load %arg3[%c0_3, %c0_4] : memref<1x512xf32, #tpu.memory_space<vmem>>, vector<1x512xf32>
    %5 = vector.broadcast %4 : vector<1x512xf32> to vector<8x512xf32>
    %6 = arith.addf %3, %5 : vector<8x512xf32>
    %cst_5 = arith.constant 0.000000e+00 : f32
    %7 = vector.broadcast %cst_5 : f32 to vector<8x512xf32>
    %8 = arith.maximumf %6, %7 : vector<8x512xf32>
    %9 = arith.truncf %8 : vector<8x512xf32> to vector<8x512xbf16>
    %10 = vector.extract_strided_slice %9 {offsets = [0, 0], sizes = [8, 256], strides = [1, 1]} : vector<8x512xbf16> to vector<8x256xbf16>
    %11 = vector.extract_strided_slice %9 {offsets = [0, 256], sizes = [8, 256], strides = [1, 1]} : vector<8x512xbf16> to vector<8x256xbf16>
    %c0_6 = arith.constant 0 : index
    %c0_7 = arith.constant 0 : index
    %12 = vector.load %arg4[%c0_6, %c0_7] : memref<256x256xbf16, #tpu.memory_space<vmem>>, vector<256x256xbf16>
    %cst_8 = arith.constant dense<0.000000e+00> : vector<8x256xf32>
    %13 = tpu.matmul %10, %12, %cst_8 {dimension_numbers = #tpu.dot_dimension_numbers<[1], [0], [0], [1], [0, 0, 1, 1], [], []>} : vector<8x256xbf16>, vector<256x256xbf16>, vector<8x256xf32> -> vector<8x256xf32>
    %c0_9 = arith.constant 0 : index
    %c0_10 = arith.constant 0 : index
    %14 = vector.load %arg5[%c0_9, %c0_10] : memref<1x256xf32, #tpu.memory_space<vmem>>, vector<1x256xf32>
    %15 = vector.broadcast %14 : vector<1x256xf32> to vector<8x256xf32>
    %16 = arith.addf %13, %15 : vector<8x256xf32>
    %cst_11 = arith.constant 0.000000e+00 : f32
    %17 = vector.broadcast %cst_11 : f32 to vector<8x256xf32>
    %18 = arith.maximumf %16, %17 : vector<8x256xf32>
    %19 = math.tanh %18 : vector<8x256xf32>
    %20 = arith.truncf %19 : vector<8x256xf32> to vector<8x256xbf16>
    %c0_12 = arith.constant 0 : index
    %c0_13 = arith.constant 0 : index
    %21 = vector.load %arg6[%c0_12, %c0_13] : memref<256x256xbf16, #tpu.memory_space<vmem>>, vector<256x256xbf16>
    %cst_14 = arith.constant dense<0.000000e+00> : vector<8x256xf32>
    %22 = tpu.matmul %11, %21, %cst_14 {dimension_numbers = #tpu.dot_dimension_numbers<[1], [0], [0], [1], [0, 0, 1, 1], [], []>} : vector<8x256xbf16>, vector<256x256xbf16>, vector<8x256xf32> -> vector<8x256xf32>
    %c0_15 = arith.constant 0 : index
    %c0_16 = arith.constant 0 : index
    %23 = vector.load %arg7[%c0_15, %c0_16] : memref<1x256xf32, #tpu.memory_space<vmem>>, vector<1x256xf32>
    %24 = vector.broadcast %23 : vector<1x256xf32> to vector<8x256xf32>
    %25 = arith.addf %22, %24 : vector<8x256xf32>
    %cst_17 = arith.constant 0.000000e+00 : f32
    %26 = vector.broadcast %cst_17 : f32 to vector<8x256xf32>
    %27 = arith.maximumf %25, %26 : vector<8x256xf32>
    %28 = arith.truncf %27 : vector<8x256xf32> to vector<8x256xbf16>
    %29 = tpu.concatenate %20, %28 in 1 : vector<8x256xbf16>, vector<8x256xbf16> -> vector<8x512xbf16>
    %c0_18 = arith.constant 0 : index
    %c0_19 = arith.constant 0 : index
    %30 = vector.load %arg8[%c0_18, %c0_19] : memref<512x128xbf16, #tpu.memory_space<vmem>>, vector<512x128xbf16>
    %cst_20 = arith.constant dense<0.000000e+00> : vector<8x128xf32>
    %31 = tpu.matmul %29, %30, %cst_20 {dimension_numbers = #tpu.dot_dimension_numbers<[1], [0], [0], [1], [0, 0, 1, 1], [], []>} : vector<8x512xbf16>, vector<512x128xbf16>, vector<8x128xf32> -> vector<8x128xf32>
    %c0_21 = arith.constant 0 : index
    %c0_22 = arith.constant 0 : index
    %32 = vector.load %arg9[%c0_21, %c0_22] : memref<1x128xf32, #tpu.memory_space<vmem>>, vector<1x128xf32>
    %33 = vector.broadcast %32 : vector<1x128xf32> to vector<8x128xf32>
    %34 = arith.addf %31, %33 : vector<8x128xf32>
    %35 = arith.truncf %34 : vector<8x128xf32> to vector<8x128xbf16>
    %c0_23 = arith.constant 0 : index
    %c0_24 = arith.constant 0 : index
    %36 = vector.load %arg10[%c0_23, %c0_24] : memref<8x128xbf16, #tpu.memory_space<vmem>>, vector<8x128xbf16>
    tpu.vector_store %arg10[%c0_23, %c0_24], %35 {strides = array<i32>} : memref<8x128xbf16, #tpu.memory_space<vmem>>, vector<8x128xbf16>,
    return
  }
  func.func @transform_0(%arg0: i32) -> (i32, i32) {
    %c0_i32 = arith.constant 0 : i32
    %c0_i32_0 = arith.constant 0 : i32
    return %arg0, %c0_i32 : i32, i32
  }
  func.func @transform_1(%arg0: i32) -> (i32, i32) {
    %c0_i32 = arith.constant 0 : i32
    %c0_i32_0 = arith.constant 0 : i32
    %c0_i32_1 = arith.constant 0 : i32
    return %c0_i32, %c0_i32_0 : i32, i32
  }
  func.func @transform_2(%arg0: i32) -> (i32, i32) {
    %c0_i32 = arith.constant 0 : i32
    %c0_i32_0 = arith.constant 0 : i32
    %c0_i32_1 = arith.constant 0 : i32
    return %c0_i32, %c0_i32_0 : i32, i32
  }
  func.func @transform_3(%arg0: i32) -> (i32, i32) {
    %c0_i32 = arith.constant 0 : i32
    %c0_i32_0 = arith.constant 0 : i32
    %c0_i32_1 = arith.constant 0 : i32
    return %c0_i32, %c0_i32_0 : i32, i32
  }
  func.func @transform_4(%arg0: i32) -> (i32, i32) {
    %c0_i32 = arith.constant 0 : i32
    %c0_i32_0 = arith.constant 0 : i32
    %c0_i32_1 = arith.constant 0 : i32
    return %c0_i32, %c0_i32_0 : i32, i32
  }
  func.func @transform_5(%arg0: i32) -> (i32, i32) {
    %c0_i32 = arith.constant 0 : i32
    %c0_i32_0 = arith.constant 0 : i32
    %c0_i32_1 = arith.constant 0 : i32
    return %c0_i32, %c0_i32_0 : i32, i32
  }
  func.func @transform_6(%arg0: i32) -> (i32, i32) {
    %c0_i32 = arith.constant 0 : i32
    %c0_i32_0 = arith.constant 0 : i32
    %c0_i32_1 = arith.constant 0 : i32
    return %c0_i32, %c0_i32_0 : i32, i32
  }
  func.func @transform_7(%arg0: i32) -> (i32, i32) {
    %c0_i32 = arith.constant 0 : i32
    %c0_i32_0 = arith.constant 0 : i32
    %c0_i32_1 = arith.constant 0 : i32
    return %c0_i32, %c0_i32_0 : i32, i32
  }
  func.func @transform_8(%arg0: i32) -> (i32, i32) {
    %c0_i32 = arith.constant 0 : i32
    %c0_i32_0 = arith.constant 0 : i32
    %c0_i32_1 = arith.constant 0 : i32
    return %c0_i32, %c0_i32_0 : i32, i32
  }
  func.func @transform_9(%arg0: i32) -> (i32, i32) {
    %c0_i32 = arith.constant 0 : i32
    %c0_i32_0 = arith.constant 0 : i32
    return %arg0, %c0_i32 : i32, i32
  }
}

</mosaic_0001>

<llo_original>
// kernel: tpu_custom_call.1
$region0: #{tpu_custom_call.1}
  #allocation0 [shape = 'u32[]', space=smem, size = 0x4, offset = 0x4, fixed_abs, tag = 'smem constant byte address 0x4 - core index']
  #allocation1 [shape = 'u32[144,128]{1,0:T(1,128)}', space=vmem, size = 0x12000, scoped, tag = 'internal scratch']
  %s0 = inlined_call_operand.hbm [shape: f32[8,64], index: 0, kind: input, shape index: {}]
  %s1 = inlined_call_operand.hbm [shape: bf16[64,512], index: 1, kind: input, shape index: {}]
  %s2 = inlined_call_operand.vmem [shape: f32[1,512], index: 2, kind: input, shape index: {}]
  %s3 = inlined_call_operand.hbm [shape: bf16[256,256], index: 3, kind: input, shape index: {}]
  %s4 = inlined_call_operand.vmem [shape: f32[1,256], index: 4, kind: input, shape index: {}]
  %s5 = inlined_call_operand.hbm [shape: bf16[256,256], index: 5, kind: input, shape index: {}]
  %s6 = inlined_call_operand.vmem [shape: f32[1,256], index: 6, kind: input, shape index: {}]
  %s7 = inlined_call_operand.hbm [shape: bf16[512,128], index: 7, kind: input, shape index: {}]
  %s8 = inlined_call_operand.vmem [shape: f32[1,128], index: 8, kind: input, shape index: {}]
  %s9 = inlined_call_operand.hbm [shape: bf16[8,128], index: 9, kind: output, shape index: {}]
  %s10 = sld [smem:[#allocation0]]
  $region66: #{tpu_custom_call.1} parent=0
    _
  %s12 = ssub.s32 1, %s10
  %s13 = scalar_select 0, %s12, %s10
  $region1: #{tpu_custom_call.1} parent=0
    #allocation2 [shape = 'u8[4096]{0}', space=vmem, size = 0x1000, scoped, tag = 'input window, operand 0, single buffered']
    #allocation3 [shape = 's32[1]{0}', space=sflag, size = 0x4, scoped, tag = 'scoped memory for tpu_custom_call.1']
    #allocation4 [shape = 's32[1]{0}', space=sflag, size = 0x4, scoped, tag = 'scoped memory for tpu_custom_call.1']
    #allocation5 [shape = 'u8[65536]{0}', space=vmem, size = 0x10000, scoped, tag = 'input window, operand 1, single buffered']
    #allocation6 [shape = 's32[1]{0}', space=sflag, size = 0x4, scoped, tag = 'scoped memory for tpu_custom_call.1']
    #allocation7 [shape = 'u8[131072]{0}', space=vmem, size = 0x20000, scoped, tag = 'input window, operand 3, single buffered']
    #allocation8 [shape = 'u8[131072]{0}', space=vmem, size = 0x20000, scoped, tag = 'input window, operand 5, single buffered']
    #allocation9 [shape = 's32[1]{0}', space=sflag, size = 0x4, scoped, tag = 'scoped memory for tpu_custom_call.1']
    #allocation10 [shape = 'u8[131072]{0}', space=vmem, size = 0x20000, scoped, tag = 'input window, operand 7, single buffered']
    #allocation11 [shape = 'u8[2048]{0}', space=vmem, size = 0x800, scoped, tag = 'output window, operand 0, single buffered']
    %14 = vsyncpa [#allocation3], 0
    %15 = vsyncpa [#allocation6], 0
    %16 = vsyncpa [#allocation9], 0
    %17 = vsyncpa [#allocation4], 0
    // Predicated region
    $region2: #{tpu_custom_call.1} parent=1 // pred_check
      _
    $region3: #{tpu_custom_call.1} parent=1 // pred_check_branch
      %19 = sbr.rel (0) target = $region5
    $region4: #{tpu_custom_call.1} parent=1 // pred_region
      %s21 = ssub.s32 128, 128
      %22 = vsyncadd [#allocation3], %s21
      %s24 = sshll.u32 [#allocation2], 4
      %s25 = int_to_ptr.vmem [resolvable:$true] %s24
      %27 = dma.hbm_to_vmem [thread:$0]  %s0, 128, %s25, [#allocation3]
    $region5: #{tpu_custom_call.1} parent=1 // pred_fallthru
      _
    // Predicated region
    $region6: #{tpu_custom_call.1} parent=1 // pred_check
      _
    $region7: #{tpu_custom_call.1} parent=1 // pred_check_branch
      %29 = sbr.rel (0) target = $region9
    $region8: #{tpu_custom_call.1} parent=1 // pred_region
      %s31 = ssub.s32 2048, 2048
      %32 = vsyncadd [#allocation6], %s31
      %s33 = sshll.u32 [#allocation5], 4
      %s34 = int_to_ptr.vmem [resolvable:$true] %s33
      %39 = dma.hbm_to_vmem [thread:$0]  %s1, 2048, %s34, [#allocation6], 256, 256, 16
    $region9: #{tpu_custom_call.1} parent=1 // pred_fallthru
      _
    // Predicated region
    $region10: #{tpu_custom_call.1} parent=1 // pred_check
      _
    $region11: #{tpu_custom_call.1} parent=1 // pred_check_branch
      %41 = sbr.rel (0) target = $region13
    $region12: #{tpu_custom_call.1} parent=1 // pred_region
      _
    $region13: #{tpu_custom_call.1} parent=1 // pred_fallthru
      _
    // Predicated region
    $region14: #{tpu_custom_call.1} parent=1 // pred_check
      _
    $region15: #{tpu_custom_call.1} parent=1 // pred_check_branch
      %43 = sbr.rel (0) target = $region17
    $region16: #{tpu_custom_call.1} parent=1 // pred_region
      %s45 = ssub.s32 4096, 4096
      %46 = vsyncadd [#allocation6], %s45
      %s47 = sshll.u32 [#allocation7], 4
      %s48 = int_to_ptr.vmem [resolvable:$true] %s47
      %53 = dma.hbm_to_vmem [thread:$0]  %s3, 4096, %s48, [#allocation6], 128, 128, 8
    $region17: #{tpu_custom_call.1} parent=1 // pred_fallthru
      _
    // Predicated region
    $region18: #{tpu_custom_call.1} parent=1 // pred_check
      _
    $region19: #{tpu_custom_call.1} parent=1 // pred_check_branch
      %55 = sbr.rel (0) target = $region21
    $region20: #{tpu_custom_call.1} parent=1 // pred_region
      _
    $region21: #{tpu_custom_call.1} parent=1 // pred_fallthru
      _
    // Predicated region
    $region22: #{tpu_custom_call.1} parent=1 // pred_check
      _
    $region23: #{tpu_custom_call.1} parent=1 // pred_check_branch
      %57 = sbr.rel (0) target = $region25
    $region24: #{tpu_custom_call.1} parent=1 // pred_region
      %s59 = ssub.s32 4096, 4096
      %60 = vsyncadd [#allocation9], %s59
      %s61 = sshll.u32 [#allocation8], 4
      %s62 = int_to_ptr.vmem [resolvable:$true] %s61
      %67 = dma.hbm_to_vmem [thread:$0]  %s5, 4096, %s62, [#allocation9], 128, 128, 8
    $region25: #{tpu_custom_call.1} parent=1 // pred_fallthru
      _
    // Predicated region
    $region26: #{tpu_custom_call.1} parent=1 // pred_check
      _
    $region27: #{tpu_custom_call.1} parent=1 // pred_check_branch
      %69 = sbr.rel (0) target = $region29
    $region28: #{tpu_custom_call.1} parent=1 // pred_region
      _
    $region29: #{tpu_custom_call.1} parent=1 // pred_fallthru
      _
    // Predicated region
    $region30: #{tpu_custom_call.1} parent=1 // pred_check
      _
    $region31: #{tpu_custom_call.1} parent=1 // pred_check_branch
      %71 = sbr.rel (0) target = $region33
    $region32: #{tpu_custom_call.1} parent=1 // pred_region
      %s73 = ssub.s32 4096, 4096
      %74 = vsyncadd [#allocation9], %s73
      %s75 = sshll.u32 [#allocation10], 4
      %s76 = int_to_ptr.vmem [resolvable:$true] %s75
      %81 = dma.hbm_to_vmem [thread:$0]  %s7, 4096, %s76, [#allocation9], 64, 64, 4
    $region33: #{tpu_custom_call.1} parent=1 // pred_fallthru
      _
    // Predicated region
    $region34: #{tpu_custom_call.1} parent=1 // pred_check
      _
    $region35: #{tpu_custom_call.1} parent=1 // pred_check_branch
      %83 = sbr.rel (0) target = $region37
    $region36: #{tpu_custom_call.1} parent=1 // pred_region
      _
    $region37: #{tpu_custom_call.1} parent=1 // pred_fallthru
      _
    // Predicated region
    $region38: #{tpu_custom_call.1} parent=1 // pred_check
      _
    $region39: #{tpu_custom_call.1} parent=1 // pred_check_branch
      %85 = sbr.rel (0) target = $region41
    $region40: #{tpu_custom_call.1} parent=1 // pred_region
      %86 = dma.done [#allocation3], 128
    $region41: #{tpu_custom_call.1} parent=1 // pred_fallthru
      _
    // Predicated region
    $region42: #{tpu_custom_call.1} parent=1 // pred_check
      _
    $region43: #{tpu_custom_call.1} parent=1 // pred_check_branch
      %88 = sbr.rel (0) target = $region45
    $region44: #{tpu_custom_call.1} parent=1 // pred_region
      %89 = dma.done [#allocation6], 2048
    $region45: #{tpu_custom_call.1} parent=1 // pred_fallthru
      _
    // Predicated region
    $region46: #{tpu_custom_call.1} parent=1 // pred_check
      _
    $region47: #{tpu_custom_call.1} parent=1 // pred_check_branch
      %91 = sbr.rel (0) target = $region49
    $region48: #{tpu_custom_call.1} parent=1 // pred_region
      %92 = dma.done [#allocation6], 4096
    $region49: #{tpu_custom_call.1} parent=1 // pred_fallthru
      _
    // Predicated region
    $region50: #{tpu_custom_call.1} parent=1 // pred_check
      _
    $region51: #{tpu_custom_call.1} parent=1 // pred_check_branch
      %94 = sbr.rel (0) target = $region53
    $region52: #{tpu_custom_call.1} parent=1 // pred_region
      %95 = dma.done [#allocation9], 4096
    $region53: #{tpu_custom_call.1} parent=1 // pred_fallthru
      _
    // Predicated region
    $region54: #{tpu_custom_call.1} parent=1 // pred_check
      _
    $region55: #{tpu_custom_call.1} parent=1 // pred_check_branch
      %97 = sbr.rel (0) target = $region57
    $region56: #{tpu_custom_call.1} parent=1 // pred_region
      %98 = dma.done [#allocation9], 4096
    $region57: #{tpu_custom_call.1} parent=1 // pred_fallthru
      _
    %v100 = vld [vmem:[#allocation2] sm:$0xff]
    %v101 = vpack.c.bf16 %v100, %v100
    %v102 = vld [vmem:[#allocation5] sm:$0xff]
    %v103 = vld [vmem:[#allocation5 + $0x8] sm:$0xff]
    %v104 = vld [vmem:[#allocation5 + $0x10] sm:$0xff]
    %v105 = vld [vmem:[#allocation5 + $0x18] sm:$0xff]
    %v106 = vld [vmem:[#allocation5 + $0x20] sm:$0xff]
    %v107 = vld [vmem:[#allocation5 + $0x28] sm:$0xff]
    %v108 = vld [vmem:[#allocation5 + $0x30] sm:$0xff]
    %v109 = vld [vmem:[#allocation5 + $0x38] sm:$0xff]
    %v110 = vld [vmem:[#allocation5 + $0x40] sm:$0xff]
    %v111 = vld [vmem:[#allocation5 + $0x48] sm:$0xff]
    %v112 = vld [vmem:[#allocation5 + $0x50] sm:$0xff]
    %v113 = vld [vmem:[#allocation5 + $0x58] sm:$0xff]
    %v114 = vld [vmem:[#allocation5 + $0x60] sm:$0xff]
    %v115 = vld [vmem:[#allocation5 + $0x68] sm:$0xff]
    %v116 = vld [vmem:[#allocation5 + $0x70] sm:$0xff]
    %v117 = vld [vmem:[#allocation5 + $0x78] sm:$0xff]
    %v118 = vld [vmem:[%s2] sm:$0xf]
    %v120 = vlaneseq
    %v121 = vshrl.u32 %v120, 7
    %v122 = vsub.s32 0, %v121
    %v123 = vrot.slane %v118, %v122
    %v124 = vlaneseq
    %v125 = vshrl.u32 %v124, 7
    %v126 = vsub.s32 1, %v125
    %v127 = vrot.slane %v118, %v126
    %v128 = vlaneseq
    %v129 = vshrl.u32 %v128, 7
    %v130 = vsub.s32 2, %v129
    %v131 = vrot.slane %v118, %v130
    %v132 = vlaneseq
    %v133 = vshrl.u32 %v132, 7
    %v134 = vsub.s32 3, %v133
    %v135 = vrot.slane %v118, %v134
    %v156 = vunpack.c.l.b16 %v102
    %v157 = vunpack.c.h.b16 %v102
    %v158 = vunpack.c.l.b16 %v103
    %v159 = vunpack.c.h.b16 %v103
    %v160 = vunpack.c.l.b16 %v104
    %v161 = vunpack.c.h.b16 %v104
    %v162 = vunpack.c.l.b16 %v105
    %v163 = vunpack.c.h.b16 %v105
    %v164 = vunpack.c.l.b16 %v106
    %v165 = vunpack.c.h.b16 %v106
    %v166 = vunpack.c.l.b16 %v107
    %v167 = vunpack.c.h.b16 %v107
    %v168 = vunpack.c.l.b16 %v108
    %v169 = vunpack.c.h.b16 %v108
    %v170 = vunpack.c.l.b16 %v109
    %v171 = vunpack.c.h.b16 %v109
    %v172 = vunpack.c.l.b16 %v110
    %v173 = vunpack.c.h.b16 %v110
    %v174 = vunpack.c.l.b16 %v111
    %v175 = vunpack.c.h.b16 %v111
    %v176 = vunpack.c.l.b16 %v112
    %v177 = vunpack.c.h.b16 %v112
    %v178 = vunpack.c.l.b16 %v113
    %v179 = vunpack.c.h.b16 %v113
    %v180 = vunpack.c.l.b16 %v114
    %v181 = vunpack.c.h.b16 %v114
    %v182 = vunpack.c.l.b16 %v115
    %v183 = vunpack.c.h.b16 %v115
    %v184 = vunpack.c.l.b16 %v116
    %v185 = vunpack.c.h.b16 %v116
    %v186 = vunpack.c.l.b16 %v117
    %v187 = vunpack.c.h.b16 %v117
    %v188 = vpack.c.b16 %v160, %v156
    %v189 = vpack.c.b16 %v161, %v157
    %v190 = vpack.c.b16 %v162, %v158
    %v191 = vpack.c.b16 %v163, %v159
    %v192 = vpack.c.b16 %v168, %v164
    %v193 = vpack.c.b16 %v169, %v165
    %v194 = vpack.c.b16 %v170, %v166
    %v195 = vpack.c.b16 %v171, %v167
    %v196 = vpack.c.b16 %v176, %v172
    %v197 = vpack.c.b16 %v177, %v173
    %v198 = vpack.c.b16 %v178, %v174
    %v199 = vpack.c.b16 %v179, %v175
    %v200 = vpack.c.b16 %v184, %v180
    %v201 = vpack.c.b16 %v185, %v181
    %v202 = vpack.c.b16 %v186, %v182
    %v203 = vpack.c.b16 %v187, %v183
    %vm220 = vcmask 523264
    %v222 = vsel %vm220, %v101, 0
    %224 = vmatprep.subr.bf16.mxu0 %v189
    %225 = vmatpush1.bf16.msra.mxu0 %v188
    %226 = vmatprep.subr.bf16.mxu0 %v193
    %227 = vmatpush1.bf16.msra.mxu0 %v192
    %228 = vmatprep.subr.bf16.mxu0 %v197
    %229 = vmatpush1.bf16.msra.mxu0 %v196
    %230 = vmatprep.subr.bf16.mxu0 %v201
    %231 = vmatpush1.bf16.msra.mxu0 %v200
    %232 = vmatprep.subr.bf16.mxu0 0
    %233 = vmatpush1.bf16.msra.mxu0 0
    %234 = vmatprep.subr.bf16.mxu0 0
    %235 = vmatpush1.bf16.msra.mxu0 0
    %236 = vmatprep.subr.bf16.mxu0 0
    %237 = vmatpush1.bf16.msra.mxu0 0
    %238 = vmatprep.subr.bf16.mxu0 0
    %239 = vmatpush1.bf16.msra.mxu0 0
    %240 = vmatprep.subr.bf16.mxu0 0
    %241 = vmatpush1.bf16.msra.mxu0 0
    %242 = vmatprep.subr.bf16.mxu0 0
    %243 = vmatpush1.bf16.msra.mxu0 0
    %244 = vmatprep.subr.bf16.mxu0 0
    %245 = vmatpush1.bf16.msra.mxu0 0
    %246 = vmatprep.subr.bf16.mxu0 0
    %247 = vmatpush1.bf16.msra.mxu0 0
    %248 = vmatprep.subr.bf16.mxu0 0
    %249 = vmatpush1.bf16.msra.mxu0 0
    %250 = vmatprep.subr.bf16.mxu0 0
    %251 = vmatpush1.bf16.msra.mxu0 0
    %252 = vmatprep.subr.bf16.mxu0 0
    %253 = vmatpush1.bf16.msra.mxu0 0
    %254 = vmatprep.subr.bf16.mxu0 0
    %255 = vmatpush1.bf16.msra.mxu0 0
    %256 = vmatprep.mubr.bf16.mxu0 0
    %257 = vmatmul.mubr.bf16.gmra.mrb[0].mxu0 %v222
    %v258 = vpop.f32.mrb[0].mxu0
    %v259 = vadd.f32 %v123, %v258
    %v260 = vpop.f32.mrb[0].mxu0
    %v261 = vadd.f32 %v127, %v260
    %v262 = vpop.f32.mrb[0].mxu0
    %v263 = vpop.f32.mrb[0].mxu0
    %264 = vdwg.mxu0
    %265 = vmatprep.subr.bf16.mxu0 %v191
    %266 = vmatpush1.bf16.msra.mxu0 %v190
    %267 = vmatprep.subr.bf16.mxu0 %v195
    %268 = vmatpush1.bf16.msra.mxu0 %v194
    %269 = vmatprep.subr.bf16.mxu0 %v199
    %270 = vmatpush1.bf16.msra.mxu0 %v198
    %271 = vmatprep.subr.bf16.mxu0 %v203
    %272 = vmatpush1.bf16.msra.mxu0 %v202
    %273 = vmatprep.subr.bf16.mxu0 0
    %274 = vmatpush1.bf16.msra.mxu0 0
    %275 = vmatprep.subr.bf16.mxu0 0
    %276 = vmatpush1.bf16.msra.mxu0 0
    %277 = vmatprep.subr.bf16.mxu0 0
    %278 = vmatpush1.bf16.msra.mxu0 0
    %279 = vmatprep.subr.bf16.mxu0 0
    %280 = vmatpush1.bf16.msra.mxu0 0
    %281 = vmatprep.subr.bf16.mxu0 0
    %282 = vmatpush1.bf16.msra.mxu0 0
    %283 = vmatprep.subr.bf16.mxu0 0
    %284 = vmatpush1.bf16.msra.mxu0 0
    %285 = vmatprep.subr.bf16.mxu0 0
    %286 = vmatpush1.bf16.msra.mxu0 0
    %287 = vmatprep.subr.bf16.mxu0 0
    %288 = vmatpush1.bf16.msra.mxu0 0
    %289 = vmatprep.subr.bf16.mxu0 0
    %290 = vmatpush1.bf16.msra.mxu0 0
    %291 = vmatprep.subr.bf16.mxu0 0
    %292 = vmatpush1.bf16.msra.mxu0 0
    %293 = vmatprep.subr.bf16.mxu0 0
    %294 = vmatpush1.bf16.msra.mxu0 0
    %295 = vmatprep.subr.bf16.mxu0 0
    %296 = vmatpush1.bf16.msra.mxu0 0
    %297 = vmatprep.mubr.bf16.mxu0 0
    %298 = vmatmul.mubr.bf16.gmra.mrb[0].mxu0 %v222
    %v299 = vpop.f32.mrb[0].mxu0
    %v300 = vadd.f32 %v131, %v299
    %v301 = vpop.f32.mrb[0].mxu0
    %v302 = vadd.f32 %v135, %v301
    %v303 = vpop.f32.mrb[0].mxu0
    %v304 = vpop.f32.mrb[0].mxu0
    %305 = vdwg.mxu0
    %v306 = vmax.f32 %v259, 0.0
    %v307 = vmax.f32 %v261, 0.0
    %v308 = vmax.f32 %v300, 0.0
    %v309 = vmax.f32 %v302, 0.0
    %v310 = vpack.c.bf16 %v306, %v306
    %v311 = vpack.c.bf16 %v307, %v307
    %v312 = vpack.c.bf16 %v308, %v308
    %v313 = vpack.c.bf16 %v309, %v309
    %v314 = vld [vmem:[#allocation7] sm:$0xff]
    %v315 = vld [vmem:[#allocation7 + $0x8] sm:$0xff]
    %v316 = vld [vmem:[#allocation7 + $0x10] sm:$0xff]
    %v317 = vld [vmem:[#allocation7 + $0x18] sm:$0xff]
    %v318 = vld [vmem:[#allocation7 + $0x20] sm:$0xff]
    %v319 = vld [vmem:[#allocation7 + $0x28] sm:$0xff]
    %v320 = vld [vmem:[#allocation7 + $0x30] sm:$0xff]
    %v321 = vld [vmem:[#allocation7 + $0x38] sm:$0xff]
    %v322 = vld [vmem:[#allocation7 + $0x40] sm:$0xff]
    %v323 = vld [vmem:[#allocation7 + $0x48] sm:$0xff]
    %v324 = vld [vmem:[#allocation7 + $0x50] sm:$0xff]
    %v325 = vld [vmem:[#allocation7 + $0x58] sm:$0xff]
    %v326 = vld [vmem:[#allocation7 + $0x60] sm:$0xff]
    %v327 = vld [vmem:[#allocation7 + $0x68] sm:$0xff]
    %v328 = vld [vmem:[#allocation7 + $0x70] sm:$0xff]
    %v329 = vld [vmem:[#allocation7 + $0x78] sm:$0xff]
    %v330 = vld [vmem:[#allocation7 + $0x80] sm:$0xff]
    %v331 = vld [vmem:[#allocation7 + $0x88] sm:$0xff]
    %v332 = vld [vmem:[#allocation7 + $0x90] sm:$0xff]
    %v333 = vld [vmem:[#allocation7 + $0x98] sm:$0xff]
    %v334 = vld [vmem:[#allocation7 + $0xa0] sm:$0xff]
    %v335 = vld [vmem:[#allocation7 + $0xa8] sm:$0xff]
    %v336 = vld [vmem:[#allocation7 + $0xb0] sm:$0xff]
    %v337 = vld [vmem:[#allocation7 + $0xb8] sm:$0xff]
    %v338 = vld [vmem:[#allocation7 + $0xc0] sm:$0xff]
    %v339 = vld [vmem:[#allocation7 + $0xc8] sm:$0xff]
    %v340 = vld [vmem:[#allocation7 + $0xd0] sm:$0xff]
    %v341 = vld [vmem:[#allocation7 + $0xd8] sm:$0xff]
    %v342 = vld [vmem:[#allocation7 + $0xe0] sm:$0xff]
    %v343 = vld [vmem:[#allocation7 + $0xe8] sm:$0xff]
    %v344 = vld [vmem:[#allocation7 + $0xf0] sm:$0xff]
    %v345 = vld [vmem:[#allocation7 + $0xf8] sm:$0xff]
    %v346 = vld [vmem:[%s4] sm:$0x3]
    %v348 = vlaneseq
    %v349 = vshrl.u32 %v348, 7
    %v350 = vsub.s32 0, %v349
    %v351 = vrot.slane %v346, %v350
    %v352 = vlaneseq
    %v353 = vshrl.u32 %v352, 7
    %v354 = vsub.s32 1, %v353
    %v355 = vrot.slane %v346, %v354
    %v390 = vunpack.c.l.b16 %v314
    %v391 = vunpack.c.h.b16 %v314
    %v392 = vunpack.c.l.b16 %v315
    %v393 = vunpack.c.h.b16 %v315
    %v394 = vunpack.c.l.b16 %v316
    %v395 = vunpack.c.h.b16 %v316
    %v396 = vunpack.c.l.b16 %v317
    %v397 = vunpack.c.h.b16 %v317
    %v398 = vunpack.c.l.b16 %v318
    %v399 = vunpack.c.h.b16 %v318
    %v400 = vunpack.c.l.b16 %v319
    %v401 = vunpack.c.h.b16 %v319
    %v402 = vunpack.c.l.b16 %v320
    %v403 = vunpack.c.h.b16 %v320
    %v404 = vunpack.c.l.b16 %v321
    %v405 = vunpack.c.h.b16 %v321
    %v406 = vunpack.c.l.b16 %v322
    %v407 = vunpack.c.h.b16 %v322
    %v408 = vunpack.c.l.b16 %v323
    %v409 = vunpack.c.h.b16 %v323
    %v410 = vunpack.c.l.b16 %v324
    %v411 = vunpack.c.h.b16 %v324
    %v412 = vunpack.c.l.b16 %v325
    %v413 = vunpack.c.h.b16 %v325
    %v414 = vunpack.c.l.b16 %v326
    %v415 = vunpack.c.h.b16 %v326
    %v416 = vunpack.c.l.b16 %v327
    %v417 = vunpack.c.h.b16 %v327
    %v418 = vunpack.c.l.b16 %v328
    %v419 = vunpack.c.h.b16 %v328
    %v420 = vunpack.c.l.b16 %v329
    %v421 = vunpack.c.h.b16 %v329
    %v422 = vunpack.c.l.b16 %v330
    %v423 = vunpack.c.h.b16 %v330
    %v424 = vunpack.c.l.b16 %v331
    %v425 = vunpack.c.h.b16 %v331
    %v426 = vunpack.c.l.b16 %v332
    %v427 = vunpack.c.h.b16 %v332
    %v428 = vunpack.c.l.b16 %v333
    %v429 = vunpack.c.h.b16 %v333
    %v430 = vunpack.c.l.b16 %v334
    %v431 = vunpack.c.h.b16 %v334
    %v432 = vunpack.c.l.b16 %v335
    %v433 = vunpack.c.h.b16 %v335
    %v434 = vunpack.c.l.b16 %v336
    %v435 = vunpack.c.h.b16 %v336
    %v436 = vunpack.c.l.b16 %v337
    %v437 = vunpack.c.h.b16 %v337
    %v438 = vunpack.c.l.b16 %v338
    %v439 = vunpack.c.h.b16 %v338
    %v440 = vunpack.c.l.b16 %v339
    %v441 = vunpack.c.h.b16 %v339
    %v442 = vunpack.c.l.b16 %v340
    %v443 = vunpack.c.h.b16 %v340
    %v444 = vunpack.c.l.b16 %v341
    %v445 = vunpack.c.h.b16 %v341
    %v446 = vunpack.c.l.b16 %v342
    %v447 = vunpack.c.h.b16 %v342
    %v448 = vunpack.c.l.b16 %v343
    %v449 = vunpack.c.h.b16 %v343
    %v450 = vunpack.c.l.b16 %v344
    %v451 = vunpack.c.h.b16 %v344
    %v452 = vunpack.c.l.b16 %v345
    %v453 = vunpack.c.h.b16 %v345
    %v454 = vpack.c.b16 %v392, %v390
    %v455 = vpack.c.b16 %v393, %v391
    %v456 = vpack.c.b16 %v396, %v394
    %v457 = vpack.c.b16 %v397, %v395
    %v458 = vpack.c.b16 %v400, %v398
    %v459 = vpack.c.b16 %v401, %v399
    %v460 = vpack.c.b16 %v404, %v402
    %v461 = vpack.c.b16 %v405, %v403
    %v462 = vpack.c.b16 %v408, %v406
    %v463 = vpack.c.b16 %v409, %v407
    %v464 = vpack.c.b16 %v412, %v410
    %v465 = vpack.c.b16 %v413, %v411
    %v466 = vpack.c.b16 %v416, %v414
    %v467 = vpack.c.b16 %v417, %v415
    %v468 = vpack.c.b16 %v420, %v418
    %v469 = vpack.c.b16 %v421, %v419
    %v470 = vpack.c.b16 %v424, %v422
    %v471 = vpack.c.b16 %v425, %v423
    %v472 = vpack.c.b16 %v428, %v426
    %v473 = vpack.c.b16 %v429, %v427
    %v474 = vpack.c.b16 %v432, %v430
    %v475 = vpack.c.b16 %v433, %v431
    %v476 = vpack.c.b16 %v436, %v434
    %v477 = vpack.c.b16 %v437, %v435
    %v478 = vpack.c.b16 %v440, %v438
    %v479 = vpack.c.b16 %v441, %v439
    %v480 = vpack.c.b16 %v444, %v442
    %v481 = vpack.c.b16 %v445, %v443
    %v482 = vpack.c.b16 %v448, %v446
    %v483 = vpack.c.b16 %v449, %v447
    %v484 = vpack.c.b16 %v452, %v450
    %v485 = vpack.c.b16 %v453, %v451
    %518 = vmatprep.subr.bf16.mxu0 %v455
    %519 = vmatpush1.bf16.msra.mxu0 %v454
    %520 = vmatprep.subr.bf16.mxu0 %v457
    %521 = vmatpush1.bf16.msra.mxu0 %v456
    %522 = vmatprep.subr.bf16.mxu0 %v459
    %523 = vmatpush1.bf16.msra.mxu0 %v458
    %524 = vmatprep.subr.bf16.mxu0 %v461
    %525 = vmatpush1.bf16.msra.mxu0 %v460
    %526 = vmatprep.subr.bf16.mxu0 %v463
    %527 = vmatpush1.bf16.msra.mxu0 %v462
    %528 = vmatprep.subr.bf16.mxu0 %v465
    %529 = vmatpush1.bf16.msra.mxu0 %v464
    %530 = vmatprep.subr.bf16.mxu0 %v467
    %531 = vmatpush1.bf16.msra.mxu0 %v466
    %532 = vmatprep.subr.bf16.mxu0 %v469
    %533 = vmatpush1.bf16.msra.mxu0 %v468
    %534 = vmatprep.subr.bf16.mxu0 %v471
    %535 = vmatpush1.bf16.msra.mxu0 %v470
    %536 = vmatprep.subr.bf16.mxu0 %v473
    %537 = vmatpush1.bf16.msra.mxu0 %v472
    %538 = vmatprep.subr.bf16.mxu0 %v475
    %539 = vmatpush1.bf16.msra.mxu0 %v474
    %540 = vmatprep.subr.bf16.mxu0 %v477
    %541 = vmatpush1.bf16.msra.mxu0 %v476
    %542 = vmatprep.subr.bf16.mxu0 %v479
    %543 = vmatpush1.bf16.msra.mxu0 %v478
    %544 = vmatprep.subr.bf16.mxu0 %v481
    %545 = vmatpush1.bf16.msra.mxu0 %v480
    %546 = vmatprep.subr.bf16.mxu0 %v483
    %547 = vmatpush1.bf16.msra.mxu0 %v482
    %548 = vmatprep.subr.bf16.mxu0 %v485
    %549 = vmatpush1.bf16.msra.mxu0 %v484
    %550 = vmatprep.mubr.bf16.mxu0 %v311
    %551 = vmatmul.mubr.bf16.gmra.mrb[0].mxu0 %v310
    %v552 = vpop.f32.mrb[0].mxu0
    %v553 = vadd.f32 %v351, %v552
    %v554 = vpop.f32.mrb[0].mxu0
    %v555 = vadd.f32 %v355, %v554
    %v556 = vpop.f32.mrb[0].mxu0
    %v557 = vpop.f32.mrb[0].mxu0
    %558 = vdwg.mxu0
    %v559 = vmax.f32 %v553, 0.0
    %v560 = vmax.f32 %v555, 0.0
    %v561 = vtanh.pop %v559
    %v562 = vtanh.pop %v560
    %v563 = vpack.c.bf16 %v561, %v561
    %v564 = vpack.c.bf16 %v562, %v562
    %v565 = vld [vmem:[#allocation8] sm:$0xff]
    %v566 = vld [vmem:[#allocation8 + $0x8] sm:$0xff]
    %v567 = vld [vmem:[#allocation8 + $0x10] sm:$0xff]
    %v568 = vld [vmem:[#allocation8 + $0x18] sm:$0xff]
    %v569 = vld [vmem:[#allocation8 + $0x20] sm:$0xff]
    %v570 = vld [vmem:[#allocation8 + $0x28] sm:$0xff]
    %v571 = vld [vmem:[#allocation8 + $0x30] sm:$0xff]
    %v572 = vld [vmem:[#allocation8 + $0x38] sm:$0xff]
    %v573 = vld [vmem:[#allocation8 + $0x40] sm:$0xff]
    %v574 = vld [vmem:[#allocation8 + $0x48] sm:$0xff]
    %v575 = vld [vmem:[#allocation8 + $0x50] sm:$0xff]
    %v576 = vld [vmem:[#allocation8 + $0x58] sm:$0xff]
    %v577 = vld [vmem:[#allocation8 + $0x60] sm:$0xff]
    %v578 = vld [vmem:[#allocation8 + $0x68] sm:$0xff]
    %v579 = vld [vmem:[#allocation8 + $0x70] sm:$0xff]
    %v580 = vld [vmem:[#allocation8 + $0x78] sm:$0xff]
    %v581 = vld [vmem:[#allocation8 + $0x80] sm:$0xff]
    %v582 = vld [vmem:[#allocation8 + $0x88] sm:$0xff]
    %v583 = vld [vmem:[#allocation8 + $0x90] sm:$0xff]
    %v584 = vld [vmem:[#allocation8 + $0x98] sm:$0xff]
    %v585 = vld [vmem:[#allocation8 + $0xa0] sm:$0xff]
    %v586 = vld [vmem:[#allocation8 + $0xa8] sm:$0xff]
    %v587 = vld [vmem:[#allocation8 + $0xb0] sm:$0xff]
    %v588 = vld [vmem:[#allocation8 + $0xb8] sm:$0xff]
    %v589 = vld [vmem:[#allocation8 + $0xc0] sm:$0xff]
    %v590 = vld [vmem:[#allocation8 + $0xc8] sm:$0xff]
    %v591 = vld [vmem:[#allocation8 + $0xd0] sm:$0xff]
    %v592 = vld [vmem:[#allocation8 + $0xd8] sm:$0xff]
    %v593 = vld [vmem:[#allocation8 + $0xe0] sm:$0xff]
    %v594 = vld [vmem:[#allocation8 + $0xe8] sm:$0xff]
    %v595 = vld [vmem:[#allocation8 + $0xf0] sm:$0xff]
    %v596 = vld [vmem:[#allocation8 + $0xf8] sm:$0xff]
    %v597 = vld [vmem:[%s6] sm:$0x3]
    %v599 = vlaneseq
    %v600 = vshrl.u32 %v599, 7
    %v601 = vsub.s32 0, %v600
    %v602 = vrot.slane %v597, %v601
    %v603 = vlaneseq
    %v604 = vshrl.u32 %v603, 7
    %v605 = vsub.s32 1, %v604
    %v606 = vrot.slane %v597, %v605
    %v641 = vunpack.c.l.b16 %v565
    %v642 = vunpack.c.h.b16 %v565
    %v643 = vunpack.c.l.b16 %v566
    %v644 = vunpack.c.h.b16 %v566
    %v645 = vunpack.c.l.b16 %v567
    %v646 = vunpack.c.h.b16 %v567
    %v647 = vunpack.c.l.b16 %v568
    %v648 = vunpack.c.h.b16 %v568
    %v649 = vunpack.c.l.b16 %v569
    %v650 = vunpack.c.h.b16 %v569
    %v651 = vunpack.c.l.b16 %v570
    %v652 = vunpack.c.h.b16 %v570
    %v653 = vunpack.c.l.b16 %v571
    %v654 = vunpack.c.h.b16 %v571
    %v655 = vunpack.c.l.b16 %v572
    %v656 = vunpack.c.h.b16 %v572
    %v657 = vunpack.c.l.b16 %v573
    %v658 = vunpack.c.h.b16 %v573
    %v659 = vunpack.c.l.b16 %v574
    %v660 = vunpack.c.h.b16 %v574
    %v661 = vunpack.c.l.b16 %v575
    %v662 = vunpack.c.h.b16 %v575
    %v663 = vunpack.c.l.b16 %v576
    %v664 = vunpack.c.h.b16 %v576
    %v665 = vunpack.c.l.b16 %v577
    %v666 = vunpack.c.h.b16 %v577
    %v667 = vunpack.c.l.b16 %v578
    %v668 = vunpack.c.h.b16 %v578
    %v669 = vunpack.c.l.b16 %v579
    %v670 = vunpack.c.h.b16 %v579
    %v671 = vunpack.c.l.b16 %v580
    %v672 = vunpack.c.h.b16 %v580
    %v673 = vunpack.c.l.b16 %v581
    %v674 = vunpack.c.h.b16 %v581
    %v675 = vunpack.c.l.b16 %v582
    %v676 = vunpack.c.h.b16 %v582
    %v677 = vunpack.c.l.b16 %v583
    %v678 = vunpack.c.h.b16 %v583
    %v679 = vunpack.c.l.b16 %v584
    %v680 = vunpack.c.h.b16 %v584
    %v681 = vunpack.c.l.b16 %v585
    %v682 = vunpack.c.h.b16 %v585
    %v683 = vunpack.c.l.b16 %v586
    %v684 = vunpack.c.h.b16 %v586
    %v685 = vunpack.c.l.b16 %v587
    %v686 = vunpack.c.h.b16 %v587
    %v687 = vunpack.c.l.b16 %v588
    %v688 = vunpack.c.h.b16 %v588
    %v689 = vunpack.c.l.b16 %v589
    %v690 = vunpack.c.h.b16 %v589
    %v691 = vunpack.c.l.b16 %v590
    %v692 = vunpack.c.h.b16 %v590
    %v693 = vunpack.c.l.b16 %v591
    %v694 = vunpack.c.h.b16 %v591
    %v695 = vunpack.c.l.b16 %v592
    %v696 = vunpack.c.h.b16 %v592
    %v697 = vunpack.c.l.b16 %v593
    %v698 = vunpack.c.h.b16 %v593
    %v699 = vunpack.c.l.b16 %v594
    %v700 = vunpack.c.h.b16 %v594
    %v701 = vunpack.c.l.b16 %v595
    %v702 = vunpack.c.h.b16 %v595
    %v703 = vunpack.c.l.b16 %v596
    %v704 = vunpack.c.h.b16 %v596
    %v705 = vpack.c.b16 %v643, %v641
    %v706 = vpack.c.b16 %v644, %v642
    %v707 = vpack.c.b16 %v647, %v645
    %v708 = vpack.c.b16 %v648, %v646
    %v709 = vpack.c.b16 %v651, %v649
    %v710 = vpack.c.b16 %v652, %v650
    %v711 = vpack.c.b16 %v655, %v653
    %v712 = vpack.c.b16 %v656, %v654
    %v713 = vpack.c.b16 %v659, %v657
    %v714 = vpack.c.b16 %v660, %v658
    %v715 = vpack.c.b16 %v663, %v661
    %v716 = vpack.c.b16 %v664, %v662
    %v717 = vpack.c.b16 %v667, %v665
    %v718 = vpack.c.b16 %v668, %v666
    %v719 = vpack.c.b16 %v671, %v669
    %v720 = vpack.c.b16 %v672, %v670
    %v721 = vpack.c.b16 %v675, %v673
    %v722 = vpack.c.b16 %v676, %v674
    %v723 = vpack.c.b16 %v679, %v677
    %v724 = vpack.c.b16 %v680, %v678
    %v725 = vpack.c.b16 %v683, %v681
    %v726 = vpack.c.b16 %v684, %v682
    %v727 = vpack.c.b16 %v687, %v685
    %v728 = vpack.c.b16 %v688, %v686
    %v729 = vpack.c.b16 %v691, %v689
    %v730 = vpack.c.b16 %v692, %v690
    %v731 = vpack.c.b16 %v695, %v693
    %v732 = vpack.c.b16 %v696, %v694
    %v733 = vpack.c.b16 %v699, %v697
    %v734 = vpack.c.b16 %v700, %v698
    %v735 = vpack.c.b16 %v703, %v701
    %v736 = vpack.c.b16 %v704, %v702
    %769 = vmatprep.subr.bf16.mxu0 %v706
    %770 = vmatpush1.bf16.msra.mxu0 %v705
    %771 = vmatprep.subr.bf16.mxu0 %v708
    %772 = vmatpush1.bf16.msra.mxu0 %v707
    %773 = vmatprep.subr.bf16.mxu0 %v710
    %774 = vmatpush1.bf16.msra.mxu0 %v709
    %775 = vmatprep.subr.bf16.mxu0 %v712
    %776 = vmatpush1.bf16.msra.mxu0 %v711
    %777 = vmatprep.subr.bf16.mxu0 %v714
    %778 = vmatpush1.bf16.msra.mxu0 %v713
    %779 = vmatprep.subr.bf16.mxu0 %v716
    %780 = vmatpush1.bf16.msra.mxu0 %v715
    %781 = vmatprep.subr.bf16.mxu0 %v718
    %782 = vmatpush1.bf16.msra.mxu0 %v717
    %783 = vmatprep.subr.bf16.mxu0 %v720
    %784 = vmatpush1.bf16.msra.mxu0 %v719
    %785 = vmatprep.subr.bf16.mxu0 %v722
    %786 = vmatpush1.bf16.msra.mxu0 %v721
    %787 = vmatprep.subr.bf16.mxu0 %v724
    %788 = vmatpush1.bf16.msra.mxu0 %v723
    %789 = vmatprep.subr.bf16.mxu0 %v726
    %790 = vmatpush1.bf16.msra.mxu0 %v725
    %791 = vmatprep.subr.bf16.mxu0 %v728
    %792 = vmatpush1.bf16.msra.mxu0 %v727
    %793 = vmatprep.subr.bf16.mxu0 %v730
    %794 = vmatpush1.bf16.msra.mxu0 %v729
    %795 = vmatprep.subr.bf16.mxu0 %v732
    %796 = vmatpush1.bf16.msra.mxu0 %v731
    %797 = vmatprep.subr.bf16.mxu0 %v734
    %798 = vmatpush1.bf16.msra.mxu0 %v733
    %799 = vmatprep.subr.bf16.mxu0 %v736
    %800 = vmatpush1.bf16.msra.mxu0 %v735
    %801 = vmatprep.mubr.bf16.mxu0 %v313
    %802 = vmatmul.mubr.bf16.gmra.mrb[0].mxu0 %v312
    %v803 = vpop.f32.mrb[0].mxu0
    %v804 = vadd.f32 %v602, %v803
    %v805 = vpop.f32.mrb[0].mxu0
    %v806 = vadd.f32 %v606, %v805
    %v807 = vpop.f32.mrb[0].mxu0
    %v808 = vpop.f32.mrb[0].mxu0
    %809 = vdwg.mxu0
    %v810 = vmax.f32 %v804, 0.0
    %v811 = vmax.f32 %v806, 0.0
    %v812 = vpack.c.bf16 %v810, %v810
    %v813 = vpack.c.bf16 %v811, %v811
    %v814 = vld [vmem:[#allocation10] sm:$0xf]
    %v815 = vld [vmem:[#allocation10 + $0x4] sm:$0xf]
    %v816 = vld [vmem:[#allocation10 + $0x8] sm:$0xf]
    %v817 = vld [vmem:[#allocation10 + $0xc] sm:$0xf]
    %v818 = vld [vmem:[#allocation10 + $0x10] sm:$0xf]
    %v819 = vld [vmem:[#allocation10 + $0x14] sm:$0xf]
    %v820 = vld [vmem:[#allocation10 + $0x18] sm:$0xf]
    %v821 = vld [vmem:[#allocation10 + $0x1c] sm:$0xf]
    %v822 = vld [vmem:[#allocation10 + $0x20] sm:$0xf]
    %v823 = vld [vmem:[#allocation10 + $0x24] sm:$0xf]
    %v824 = vld [vmem:[#allocation10 + $0x28] sm:$0xf]
    %v825 = vld [vmem:[#allocation10 + $0x2c] sm:$0xf]
    %v826 = vld [vmem:[#allocation10 + $0x30] sm:$0xf]
    %v827 = vld [vmem:[#allocation10 + $0x34] sm:$0xf]
    %v828 = vld [vmem:[#allocation10 + $0x38] sm:$0xf]
    %v829 = vld [vmem:[#allocation10 + $0x3c] sm:$0xf]
    %v830 = vld [vmem:[#allocation10 + $0x40] sm:$0xf]
    %v831 = vld [vmem:[#allocation10 + $0x44] sm:$0xf]
    %v832 = vld [vmem:[#allocation10 + $0x48] sm:$0xf]
    %v833 = vld [vmem:[#allocation10 + $0x4c] sm:$0xf]
    %v834 = vld [vmem:[#allocation10 + $0x50] sm:$0xf]
    %v835 = vld [vmem:[#allocation10 + $0x54] sm:$0xf]
    %v836 = vld [vmem:[#allocation10 + $0x58] sm:$0xf]
    %v837 = vld [vmem:[#allocation10 + $0x5c] sm:$0xf]
    %v838 = vld [vmem:[#allocation10 + $0x60] sm:$0xf]
    %v839 = vld [vmem:[#allocation10 + $0x64] sm:$0xf]
    %v840 = vld [vmem:[#allocation10 + $0x68] sm:$0xf]
    %v841 = vld [vmem:[#allocation10 + $0x6c] sm:$0xf]
    %v842 = vld [vmem:[#allocation10 + $0x70] sm:$0xf]
    %v843 = vld [vmem:[#allocation10 + $0x74] sm:$0xf]
    %v844 = vld [vmem:[#allocation10 + $0x78] sm:$0xf]
    %v845 = vld [vmem:[#allocation10 + $0x7c] sm:$0xf]
    %v846 = vld [vmem:[#allocation10 + $0x80] sm:$0xf]
    %v847 = vld [vmem:[#allocation10 + $0x84] sm:$0xf]
    %v848 = vld [vmem:[#allocation10 + $0x88] sm:$0xf]
    %v849 = vld [vmem:[#allocation10 + $0x8c] sm:$0xf]
    %v850 = vld [vmem:[#allocation10 + $0x90] sm:$0xf]
    %v851 = vld [vmem:[#allocation10 + $0x94] sm:$0xf]
    %v852 = vld [vmem:[#allocation10 + $0x98] sm:$0xf]
    %v853 = vld [vmem:[#allocation10 + $0x9c] sm:$0xf]
    %v854 = vld [vmem:[#allocation10 + $0xa0] sm:$0xf]
    %v855 = vld [vmem:[#allocation10 + $0xa4] sm:$0xf]
    %v856 = vld [vmem:[#allocation10 + $0xa8] sm:$0xf]
    %v857 = vld [vmem:[#allocation10 + $0xac] sm:$0xf]
    %v858 = vld [vmem:[#allocation10 + $0xb0] sm:$0xf]
    %v859 = vld [vmem:[#allocation10 + $0xb4] sm:$0xf]
    %v860 = vld [vmem:[#allocation10 + $0xb8] sm:$0xf]
    %v861 = vld [vmem:[#allocation10 + $0xbc] sm:$0xf]
    %v862 = vld [vmem:[#allocation10 + $0xc0] sm:$0xf]
    %v863 = vld [vmem:[#allocation10 + $0xc4] sm:$0xf]
    %v864 = vld [vmem:[#allocation10 + $0xc8] sm:$0xf]
    %v865 = vld [vmem:[#allocation10 + $0xcc] sm:$0xf]
    %v866 = vld [vmem:[#allocation10 + $0xd0] sm:$0xf]
    %v867 = vld [vmem:[#allocation10 + $0xd4] sm:$0xf]
    %v868 = vld [vmem:[#allocation10 + $0xd8] sm:$0xf]
    %v869 = vld [vmem:[#allocation10 + $0xdc] sm:$0xf]
    %v870 = vld [vmem:[#allocation10 + $0xe0] sm:$0xf]
    %v871 = vld [vmem:[#allocation10 + $0xe4] sm:$0xf]
    %v872 = vld [vmem:[#allocation10 + $0xe8] sm:$0xf]
    %v873 = vld [vmem:[#allocation10 + $0xec] sm:$0xf]
    %v874 = vld [vmem:[#allocation10 + $0xf0] sm:$0xf]
    %v875 = vld [vmem:[#allocation10 + $0xf4] sm:$0xf]
    %v876 = vld [vmem:[#allocation10 + $0xf8] sm:$0xf]
    %v877 = vld [vmem:[#allocation10 + $0xfc] sm:$0xf]
    %v878 = vld [vmem:[%s8] sm:$0x1]
    %v880 = vlaneseq
    %v881 = vshrl.u32 %v880, 7
    %v882 = vsub.s32 0, %v881
    %v883 = vrot.slane %v878, %v882
    %v949 = vunpack.c.l.b16 %v814
    %v950 = vunpack.c.l.b16 %v815
    %v951 = vunpack.c.l.b16 %v816
    %v952 = vunpack.c.l.b16 %v817
    %v953 = vunpack.c.l.b16 %v818
    %v954 = vunpack.c.l.b16 %v819
    %v955 = vunpack.c.l.b16 %v820
    %v956 = vunpack.c.l.b16 %v821
    %v957 = vunpack.c.l.b16 %v822
    %v958 = vunpack.c.l.b16 %v823
    %v959 = vunpack.c.l.b16 %v824
    %v960 = vunpack.c.l.b16 %v825
    %v961 = vunpack.c.l.b16 %v826
    %v962 = vunpack.c.l.b16 %v827
    %v963 = vunpack.c.l.b16 %v828
    %v964 = vunpack.c.l.b16 %v829
    %v965 = vunpack.c.l.b16 %v830
    %v966 = vunpack.c.l.b16 %v831
    %v967 = vunpack.c.l.b16 %v832
    %v968 = vunpack.c.l.b16 %v833
    %v969 = vunpack.c.l.b16 %v834
    %v970 = vunpack.c.l.b16 %v835
    %v971 = vunpack.c.l.b16 %v836
    %v972 = vunpack.c.l.b16 %v837
    %v973 = vunpack.c.l.b16 %v838
    %v974 = vunpack.c.l.b16 %v839
    %v975 = vunpack.c.l.b16 %v840
    %v976 = vunpack.c.l.b16 %v841
    %v977 = vunpack.c.l.b16 %v842
    %v978 = vunpack.c.l.b16 %v843
    %v979 = vunpack.c.l.b16 %v844
    %v980 = vunpack.c.l.b16 %v845
    %v981 = vunpack.c.l.b16 %v846
    %v982 = vunpack.c.l.b16 %v847
    %v983 = vunpack.c.l.b16 %v848
    %v984 = vunpack.c.l.b16 %v849
    %v985 = vunpack.c.l.b16 %v850
    %v986 = vunpack.c.l.b16 %v851
    %v987 = vunpack.c.l.b16 %v852
    %v988 = vunpack.c.l.b16 %v853
    %v989 = vunpack.c.l.b16 %v854
    %v990 = vunpack.c.l.b16 %v855
    %v991 = vunpack.c.l.b16 %v856
    %v992 = vunpack.c.l.b16 %v857
    %v993 = vunpack.c.l.b16 %v858
    %v994 = vunpack.c.l.b16 %v859
    %v995 = vunpack.c.l.b16 %v860
    %v996 = vunpack.c.l.b16 %v861
    %v997 = vunpack.c.l.b16 %v862
    %v998 = vunpack.c.l.b16 %v863
    %v999 = vunpack.c.l.b16 %v864
    %v1000 = vunpack.c.l.b16 %v865
    %v1001 = vunpack.c.l.b16 %v866
    %v1002 = vunpack.c.l.b16 %v867
    %v1003 = vunpack.c.l.b16 %v868
    %v1004 = vunpack.c.l.b16 %v869
    %v1005 = vunpack.c.l.b16 %v870
    %v1006 = vunpack.c.l.b16 %v871
    %v1007 = vunpack.c.l.b16 %v872
    %v1008 = vunpack.c.l.b16 %v873
    %v1009 = vunpack.c.l.b16 %v874
    %v1010 = vunpack.c.l.b16 %v875
    %v1011 = vunpack.c.l.b16 %v876
    %v1012 = vunpack.c.l.b16 %v877
    %v1013 = vpack.c.b16 %v950, %v949
    %v1014 = vpack.c.b16 %v952, %v951
    %v1015 = vpack.c.b16 %v954, %v953
    %v1016 = vpack.c.b16 %v956, %v955
    %v1017 = vpack.c.b16 %v958, %v957
    %v1018 = vpack.c.b16 %v960, %v959
    %v1019 = vpack.c.b16 %v962, %v961
    %v1020 = vpack.c.b16 %v964, %v963
    %v1021 = vpack.c.b16 %v966, %v965
    %v1022 = vpack.c.b16 %v968, %v967
    %v1023 = vpack.c.b16 %v970, %v969
    %v1024 = vpack.c.b16 %v972, %v971
    %v1025 = vpack.c.b16 %v974, %v973
    %v1026 = vpack.c.b16 %v976, %v975
    %v1027 = vpack.c.b16 %v978, %v977
    %v1028 = vpack.c.b16 %v980, %v979
    %v1029 = vpack.c.b16 %v982, %v981
    %v1030 = vpack.c.b16 %v984, %v983
    %v1031 = vpack.c.b16 %v986, %v985
    %v1032 = vpack.c.b16 %v988, %v987
    %v1033 = vpack.c.b16 %v990, %v989
    %v1034 = vpack.c.b16 %v992, %v991
    %v1035 = vpack.c.b16 %v994, %v993
    %v1036 = vpack.c.b16 %v996, %v995
    %v1037 = vpack.c.b16 %v998, %v997
    %v1038 = vpack.c.b16 %v1000, %v999
    %v1039 = vpack.c.b16 %v1002, %v1001
    %v1040 = vpack.c.b16 %v1004, %v1003
    %v1041 = vpack.c.b16 %v1006, %v1005
    %v1042 = vpack.c.b16 %v1008, %v1007
    %v1043 = vpack.c.b16 %v1010, %v1009
    %v1044 = vpack.c.b16 %v1012, %v1011
    %1077 = vmatprep.subr.bf16.mxu0 0
    %1078 = vmatpush1.bf16.msra.mxu0 %v1013
    %1079 = vmatprep.subr.bf16.mxu0 0
    %1080 = vmatpush1.bf16.msra.mxu0 %v1014
    %1081 = vmatprep.subr.bf16.mxu0 0
    %1082 = vmatpush1.bf16.msra.mxu0 %v1015
    %1083 = vmatprep.subr.bf16.mxu0 0
    %1084 = vmatpush1.bf16.msra.mxu0 %v1016
    %1085 = vmatprep.subr.bf16.mxu0 0
    %1086 = vmatpush1.bf16.msra.mxu0 %v1017
    %1087 = vmatprep.subr.bf16.mxu0 0
    %1088 = vmatpush1.bf16.msra.mxu0 %v1018
    %1089 = vmatprep.subr.bf16.mxu0 0
    %1090 = vmatpush1.bf16.msra.mxu0 %v1019
    %1091 = vmatprep.subr.bf16.mxu0 0
    %1092 = vmatpush1.bf16.msra.mxu0 %v1020
    %1093 = vmatprep.subr.bf16.mxu0 0
    %1094 = vmatpush1.bf16.msra.mxu0 %v1021
    %1095 = vmatprep.subr.bf16.mxu0 0
    %1096 = vmatpush1.bf16.msra.mxu0 %v1022
    %1097 = vmatprep.subr.bf16.mxu0 0
    %1098 = vmatpush1.bf16.msra.mxu0 %v1023
    %1099 = vmatprep.subr.bf16.mxu0 0
    %1100 = vmatpush1.bf16.msra.mxu0 %v1024
    %1101 = vmatprep.subr.bf16.mxu0 0
    %1102 = vmatpush1.bf16.msra.mxu0 %v1025
    %1103 = vmatprep.subr.bf16.mxu0 0
    %1104 = vmatpush1.bf16.msra.mxu0 %v1026
    %1105 = vmatprep.subr.bf16.mxu0 0
    %1106 = vmatpush1.bf16.msra.mxu0 %v1027
    %1107 = vmatprep.subr.bf16.mxu0 0
    %1108 = vmatpush1.bf16.msra.mxu0 %v1028
    %1109 = vmatprep.mubr.bf16.mxu0 %v564
    %1110 = vmatmul.mubr.bf16.gmra.mrb[0].mxu0 %v563
    %v1111 = vpop.f32.mrb[0].mxu0
    %v1112 = vadd.f32 %v883, %v1111
    %v1113 = vpop.f32.mrb[0].mxu0
    %v1114 = vpop.f32.mrb[0].mxu0
    %v1115 = vpop.f32.mrb[0].mxu0
    %1116 = vdwg.mxu0
    %1117 = vmatprep.subr.bf16.mxu0 0
    %1118 = vmatpush1.bf16.msra.mxu0 %v1029
    %1119 = vmatprep.subr.bf16.mxu0 0
    %1120 = vmatpush1.bf16.msra.mxu0 %v1030
    %1121 = vmatprep.subr.bf16.mxu0 0
    %1122 = vmatpush1.bf16.msra.mxu0 %v1031
    %1123 = vmatprep.subr.bf16.mxu0 0
    %1124 = vmatpush1.bf16.msra.mxu0 %v1032
    %1125 = vmatprep.subr.bf16.mxu0 0
    %1126 = vmatpush1.bf16.msra.mxu0 %v1033
    %1127 = vmatprep.subr.bf16.mxu0 0
    %1128 = vmatpush1.bf16.msra.mxu0 %v1034
    %1129 = vmatprep.subr.bf16.mxu0 0
    %1130 = vmatpush1.bf16.msra.mxu0 %v1035
    %1131 = vmatprep.subr.bf16.mxu0 0
    %1132 = vmatpush1.bf16.msra.mxu0 %v1036
    %1133 = vmatprep.subr.bf16.mxu0 0
    %1134 = vmatpush1.bf16.msra.mxu0 %v1037
    %1135 = vmatprep.subr.bf16.mxu0 0
    %1136 = vmatpush1.bf16.msra.mxu0 %v1038
    %1137 = vmatprep.subr.bf16.mxu0 0
    %1138 = vmatpush1.bf16.msra.mxu0 %v1039
    %1139 = vmatprep.subr.bf16.mxu0 0
    %1140 = vmatpush1.bf16.msra.mxu0 %v1040
    %1141 = vmatprep.subr.bf16.mxu0 0
    %1142 = vmatpush1.bf16.msra.mxu0 %v1041
    %1143 = vmatprep.subr.bf16.mxu0 0
    %1144 = vmatpush1.bf16.msra.mxu0 %v1042
    %1145 = vmatprep.subr.bf16.mxu0 0
    %1146 = vmatpush1.bf16.msra.mxu0 %v1043
    %1147 = vmatprep.subr.bf16.mxu0 0
    %1148 = vmatpush1.bf16.msra.mxu0 %v1044
    %1149 = vmatprep.mubr.bf16.mxu0 %v813
    %1150 = vmatmul.mubr.bf16.gmra.mrb[0].mxu0 %v812
    %v1151 = vpop.f32.mrb[0].mxu0
    %v1152 = vadd.f32 %v1112, %v1151
    %v1153 = vpop.f32.mrb[0].mxu0
    %v1154 = vpop.f32.mrb[0].mxu0
    %v1155 = vpop.f32.mrb[0].mxu0
    %1156 = vdwg.mxu0
    %v1157 = vpack.c.bf16 %v1152, %v1152
    %1158 = vst [vmem:[#allocation11] sm:$0xf] %v1157
    // Predicated region
    $region58: #{tpu_custom_call.1} parent=1 // pred_check
      _
    $region59: #{tpu_custom_call.1} parent=1 // pred_check_branch
      %1160 = sbr.rel (0) target = $region61
    $region60: #{tpu_custom_call.1} parent=1 // pred_region
      %s1162 = ssub.s32 64, 64
      %1163 = vsyncadd [#allocation4], %s1162
      %s1165 = sshll.u32 [#allocation11], 4
      %s1166 = int_to_ptr.vmem [resolvable:$true] %s1165
      %1168 = dma.vmem_to_hbm [thread:$0]  %s1166, 64, %s9, [#allocation4]
    $region61: #{tpu_custom_call.1} parent=1 // pred_fallthru
      _
    // Predicated region
    $region62: #{tpu_custom_call.1} parent=1 // pred_check
      _
    $region63: #{tpu_custom_call.1} parent=1 // pred_check_branch
      %1170 = sbr.rel (0) target = $region65
    $region64: #{tpu_custom_call.1} parent=1 // pred_region
      %1171 = dma.done [#allocation4], 64
    $region65: #{tpu_custom_call.1} parent=1 // pred_fallthru
      _
    %1172 = vsyncpa [#allocation3], 1
    %1173 = vsyncpa [#allocation6], 1
    %1174 = vsyncpa [#allocation9], 1
    %1175 = vsyncpa [#allocation4], 1

</llo_original>
